<compile_context>
chip_gen: v5e
topology: v5e:2x2
jax: 0.10.0
libtpu: 0.0.40
codegen_flags: <defaults>
</compile_context>

<pallas_src>
import functools

import jax
import jax.numpy as jnp
from jax.experimental import pallas as pl
from jax.experimental.pallas import tpu as pltpu


def _round_up(a, b):
    return (a + b - 1) // b * b


def _softshrink(x, lam):
    return jnp.where(x > lam, x - lam,
                     jnp.where(x < -lam, x + lam, jnp.zeros_like(x)))


def _erf(x):
    # Abramowitz & Stegun 7.1.26 (|err| <= 1.5e-7).  The 1/(1+p*|x|) term uses the
    # EUP approximate-reciprocal slot instead of a VPU divide.
    a1, a2, a3, a4, a5 = 0.254829592, -0.284496736, 1.421413741, -1.453152027, 1.061405429
    p = 0.3275911
    s = jnp.where(x >= 0, 1.0, -1.0)
    ax = jnp.abs(x)
    t = pl.reciprocal(1.0 + p * ax, approx=True)
    poly = ((((a5 * t + a4) * t + a3) * t + a2) * t + a1) * t
    return s * (1.0 - poly * jnp.exp(-ax * ax))


def _gelu_exact(x):
    return 0.5 * x * (1.0 + _erf(x * 0.7071067811865475))


# ---------------------------------------------------------------------------
# Kernel 1: LayerNorm (norm1)
# ---------------------------------------------------------------------------
def layernorm_kernel(x_ref, g_ref, b_ref, o_ref, *, eps):
    x = x_ref[...].astype(jnp.float32)
    mu = jnp.mean(x, axis=-1, keepdims=True)
    xc = x - mu
    var = jnp.mean(xc * xc, axis=-1, keepdims=True)
    y = xc * jax.lax.rsqrt(var + eps) * g_ref[...] + b_ref[...]
    o_ref[...] = y.astype(o_ref.dtype)


def layernorm(x, gamma, beta, *, eps=1e-5):
    B, N, C = x.shape
    T = B * N
    t_tile = min(512, _round_up(T, 8))          # mem-bound: bigger tiles -> roofline
    T_pad = _round_up(T, t_tile)
    xt = x.reshape(T, C)
    if T_pad != T:
        xt = jnp.pad(xt, ((0, T_pad - T), (0, 0)))
    out = pl.pallas_call(
        functools.partial(layernorm_kernel, eps=eps),
        out_shape=jax.ShapeDtypeStruct((T_pad, C), x.dtype),
        grid=(T_pad // t_tile,),
        in_specs=[
            pl.BlockSpec((t_tile, C), lambda i: (i, 0)),
            pl.BlockSpec((1, C), lambda i: (0, 0)),
            pl.BlockSpec((1, C), lambda i: (0, 0)),
        ],
        out_specs=pl.BlockSpec((t_tile, C), lambda i: (i, 0)),
        compiler_params=pltpu.CompilerParams(dimension_semantics=("parallel",)),
    )(xt, gamma.reshape(1, C), beta.reshape(1, C))
    return out[:T].reshape(B, N, C)


# ---------------------------------------------------------------------------
# Kernel 2: AFNO1D frequency-domain block-diagonal complex MLP (the hot path)
# ---------------------------------------------------------------------------
def afno_freq_kernel(x_ref, a1_ref, b1_ref, a2_ref, b2_ref, o_ref, *, lam):
    # x_ref : (g, f*2bs , Mt)       bf16   [xr ; xi] per block, modes on lanes
    # a1_ref: (g, f*2bsf, f*2bs)    bf16   grouped block-diagonal complex weight L1
    # b1_ref: (g, f*2bsf)           f32
    # a2_ref: (g, f*2bs , f*2bsf)   bf16   grouped block-diagonal complex weight L2
    # b2_ref: (g, f*2bs)            f32
    # o_ref : (g, f*2bs , Mt)       bf16   [o2r ; o2i]
    x = x_ref[...]
    h = jnp.einsum('ghi,gim->ghm', a1_ref[...], x,
                   preferred_element_type=jnp.float32)
    h = jax.nn.relu(h + b1_ref[...][:, :, None])
    y = jnp.einsum('goh,ghm->gom', a2_ref[...], h.astype(a2_ref.dtype),
                   preferred_element_type=jnp.float32)
    y = y + b2_ref[...][:, :, None]
    o_ref[...] = _softshrink(y, lam).astype(o_ref.dtype)


def afno1d_spectral(x, params, *, num_blocks, sparsity_threshold=0.01,
                    hard_thresholding_fraction=1.0):
    """Spectral part of AFNO1D.forward: x (B,N,C) real -> irfft(filtered) (B,N,C).
    NOTE: does NOT add the residual bias (fused downstream into ln_mlp)."""
    w1, b1, w2, b2 = params
    in_dtype = x.dtype
    xf = x.astype(jnp.float32)
    B, N, C = xf.shape
    nb = num_blocks
    bs = C // nb
    bsf = w1.shape[-1]                     # block_size * hidden_size_factor

    # TODO(synk): rfft/irfft have no Pallas TPU primitive; kept in plain JAX/XLA.
    xc = jnp.fft.rfft(xf, axis=1, norm='ortho')          # (B, M, C) complex64
    total_modes = N // 2 + 1
    kept = int(total_modes * hard_thresholding_fraction)

    # (B, nb, 2*bs, kept): [real | imag] per block, modes on the lane axis.
    # Intermediates kept in bf16 so the layout transpose only moves half the bytes.
    z = xc[:, :kept].reshape(B, kept, nb, bs)
    xs = jnp.concatenate([jnp.real(z), jnp.imag(z)], axis=-1).astype(jnp.bfloat16)
    xs = jnp.transpose(xs, (0, 2, 3, 1))                 # (B, nb, 2bs, kept)

    m_tile = min(1024, _round_up(kept, 128))
    m_pad = _round_up(kept, m_tile)
    if m_pad != kept:
        xs = jnp.pad(xs, ((0, 0), (0, 0), (0, 0), (0, m_pad - kept)))

    # Fused complex weights: [o_r ; o_i] = A @ [x_r ; x_i] + [b_r ; b_i]
    w1r_t, w1i_t = jnp.swapaxes(w1[0], 1, 2), jnp.swapaxes(w1[1], 1, 2)  # (nb, bsf, bs)
    a1 = jnp.concatenate(
        [jnp.concatenate([w1r_t, -w1i_t], axis=-1),
         jnp.concatenate([w1i_t,  w1r_t], axis=-1)], axis=1)             # (nb, 2bsf, 2bs)
    b1s = jnp.concatenate([b1[0], b1[1]], axis=-1)                       # (nb, 2bsf)
    w2r_t, w2i_t = jnp.swapaxes(w2[0], 1, 2), jnp.swapaxes(w2[1], 1, 2)  # (nb, bs, bsf)
    a2 = jnp.concatenate(
        [jnp.concatenate([w2r_t, -w2i_t], axis=-1),
         jnp.concatenate([w2i_t,  w2r_t], axis=-1)], axis=1)             # (nb, 2bs, 2bsf)
    b2s = jnp.concatenate([b2[0], b2[1]], axis=-1)                       # (nb, 2bs)

    # MXU-shape fix: fold `f` blocks into one block-diagonal matmul when the
    # contracted dim 2*bs is well below the 128-wide systolic contraction.
    f = nb
    for cand in range(1, nb + 1):
        if nb % cand == 0 and cand * 2 * bs >= 128:
            f = cand
            break
    g = nb // f

    def _group_blockdiag(w):          # (nb, R, Cc) -> (g, f*R, f*Cc) block-diag
        _, R, Cc = w.shape
        wg = w.reshape(g, f, R, Cc)
        eye = jnp.eye(f, dtype=w.dtype)
        return jnp.einsum('garc,ab->garbc', wg, eye).reshape(g, f * R, f * Cc)

    a1g = _group_blockdiag(a1).astype(jnp.bfloat16)      # (g, f*2bsf, f*2bs)
    a2g = _group_blockdiag(a2).astype(jnp.bfloat16)      # (g, f*2bs , f*2bsf)
    b1g = b1s.reshape(g, f * 2 * bsf).astype(jnp.float32)
    b2g = b2s.reshape(g, f * 2 * bs).astype(jnp.float32)
    xg = xs.reshape(B, g, f * 2 * bs, m_pad)

    kernel = functools.partial(afno_freq_kernel, lam=float(sparsity_threshold))
    y = pl.pallas_call(
        kernel,
        out_shape=jax.ShapeDtypeStruct((B, g, f * 2 * bs, m_pad), jnp.bfloat16),
        grid=(B, m_pad // m_tile),
        in_specs=[
            pl.BlockSpec((None, g, f * 2 * bs, m_tile), lambda b, m: (b, 0, 0, m)),
            pl.BlockSpec((g, f * 2 * bsf, f * 2 * bs), lambda b, m: (0, 0, 0)),
            pl.BlockSpec((g, f * 2 * bsf), lambda b, m: (0, 0)),
            pl.BlockSpec((g, f * 2 * bs, f * 2 * bsf), lambda b, m: (0, 0, 0)),
            pl.BlockSpec((g, f * 2 * bs), lambda b, m: (0, 0)),
        ],
        out_specs=pl.BlockSpec((None, g, f * 2 * bs, m_tile),
                               lambda b, m: (b, 0, 0, m)),
        compiler_params=pltpu.CompilerParams(
            dimension_semantics=("parallel", "parallel"),
            vmem_limit_bytes=64 * 1024 * 1024),
    )(xg, a1g, b1g, a2g, b2g)

    # Back to the complex spectrum (B, M, C); truncated modes stay zero.
    y = y.reshape(B, nb, 2 * bs, m_pad)[..., :kept]                 # bf16
    yt = jnp.transpose(y, (0, 3, 1, 2)).astype(jnp.float32)         # (B, kept, nb, 2bs)
    yr = yt[..., :bs].reshape(B, kept, C)
    yi = yt[..., bs:].reshape(B, kept, C)
    oc = jax.lax.complex(yr, yi)
    if total_modes > kept:
        oc = jnp.pad(oc, ((0, 0), (0, total_modes - kept), (0, 0)))
    out = jnp.fft.irfft(oc, n=N, axis=1, norm='ortho')
    return out.astype(in_dtype)


# ---------------------------------------------------------------------------
# Kernel 3: fused [afno bias add + double-skip] + norm2 + MLP (fc1->GELU->fc2)
#           + final residual
# ---------------------------------------------------------------------------
def ln_mlp_kernel(spec_ref, ln1_ref, x_ref, g_ref, bt_ref, w1_ref, b1_ref,
                  w2_ref, b2_ref, o_ref, *, eps, double_skip):
    # filter output = irfft(spectrum) + norm1(x)   (AFNO1D's "+ bias")
    filt = spec_ref[...].astype(jnp.float32) + ln1_ref[...].astype(jnp.float32)
    xin = x_ref[...].astype(jnp.float32)
    if double_skip:
        s = filt + xin          # x = filter + residual ; residual = x
        resid = s
    else:
        s = filt
        resid = xin
    mu = jnp.mean(s, axis=-1, keepdims=True)
    sc = s - mu
    var = jnp.mean(sc * sc, axis=-1, keepdims=True)
    y = sc * jax.lax.rsqrt(var + eps) * g_ref[...] + bt_ref[...]
    # bf16 MXU operands, f32 accumulation.
    h = jnp.dot(y.astype(jnp.bfloat16), w1_ref[...],
                preferred_element_type=jnp.float32) + b1_ref[...]
    h = _gelu_exact(h)
    z = jnp.dot(h.astype(jnp.bfloat16), w2_ref[...],
                preferred_element_type=jnp.float32) + b2_ref[...]
    o_ref[...] = (resid + z).astype(o_ref.dtype)


def ln_mlp_fused(spec, ln1, x, gamma, beta, w1, b1, w2, b2, *, eps=1e-5,
                 double_skip=True):
    B, N, C = x.shape
    H = w1.shape[1]
    T = B * N
    t_tile = min(512, _round_up(T, 8))
    T_pad = _round_up(T, t_tile)

    def flat(a):
        a = a.reshape(T, C)
        if T_pad != T:
            a = jnp.pad(a, ((0, T_pad - T), (0, 0)))
        return a

    st, lt, xt = flat(spec), flat(ln1), flat(x)
    out = pl.pallas_call(
        functools.partial(ln_mlp_kernel, eps=eps, double_skip=double_skip),
        out_shape=jax.ShapeDtypeStruct((T_pad, C), x.dtype),
        grid=(T_pad // t_tile,),
        in_specs=[
            pl.BlockSpec((t_tile, C), lambda i: (i, 0)),
            pl.BlockSpec((t_tile, C), lambda i: (i, 0)),
            pl.BlockSpec((t_tile, C), lambda i: (i, 0)),
            pl.BlockSpec((1, C), lambda i: (0, 0)),
            pl.BlockSpec((1, C), lambda i: (0, 0)),
            pl.BlockSpec((C, H), lambda i: (0, 0)),
            pl.BlockSpec((1, H), lambda i: (0, 0)),
            pl.BlockSpec((H, C), lambda i: (0, 0)),
            pl.BlockSpec((1, C), lambda i: (0, 0)),
        ],
        out_specs=pl.BlockSpec((t_tile, C), lambda i: (i, 0)),
        compiler_params=pltpu.CompilerParams(
            dimension_semantics=("parallel",),
            vmem_limit_bytes=64 * 1024 * 1024),
    )(st, lt, xt, gamma.reshape(1, C), beta.reshape(1, C),
      w1.astype(jnp.bfloat16), b1.reshape(1, H).astype(jnp.float32),
      w2.astype(jnp.bfloat16), b2.reshape(1, C).astype(jnp.float32))
    return out[:T].reshape(B, N, C)


# ---------------------------------------------------------------------------
# AFNO_Block forward (drop / drop_path are 0 -> identity)
# ---------------------------------------------------------------------------
def afno_block_forward(x, params, *, num_blocks, sparsity_threshold=0.01,
                       hard_thresholding_fraction=1.0, double_skip=True,
                       eps=1e-5):
    (g1, be1, w1, b1, w2, b2, g2, be2, fw1, fb1, fw2, fb2) = params
    h = layernorm(x, g1, be1, eps=eps)                                  # norm1
    spec = afno1d_spectral(h, (w1, b1, w2, b2), num_blocks=num_blocks,
                           sparsity_threshold=sparsity_threshold,
                           hard_thresholding_fraction=hard_thresholding_fraction)
    # afno bias add, double-skip, norm2, MLP and final residual all fused:
    return ln_mlp_fused(spec, h, x, g2, be2, fw1, fb1, fw2, fb2, eps=eps,
                        double_skip=double_skip)


# ---------------------------------------------------------------------------
# Pure-JAX reference mirroring the torch module (f32 everywhere)
# ---------------------------------------------------------------------------
def _reference_block(x, params, *, num_blocks, sparsity_threshold=0.01,
                     hard_thresholding_fraction=1.0, double_skip=True, eps=1e-5):
    (g1, be1, w1, b1, w2, b2, g2, be2, fw1, fb1, fw2, fb2) = params

    def ln(v, g, b):
        mu = jnp.mean(v, axis=-1, keepdims=True)
        var = jnp.mean((v - mu) ** 2, axis=-1, keepdims=True)
        return (v - mu) * jax.lax.rsqrt(var + eps) * g + b

    def afno(v):
        bias_v = v
        vf = v.astype(jnp.float32)
        B, N, C = vf.shape
        bs = C // num_blocks
        xc = jnp.fft.rfft(vf, axis=1, norm='ortho')
        M = N // 2 + 1
        kept = int(M * hard_thresholding_fraction)
        xc = xc.reshape(B, M, num_blocks, bs)
        xr, xi = jnp.real(xc)[:, :kept], jnp.imag(xc)[:, :kept]
        o1r = jax.nn.relu(jnp.einsum('...bi,bio->...bo', xr, w1[0])
                          - jnp.einsum('...bi,bio->...bo', xi, w1[1]) + b1[0])
        o1i = jax.nn.relu(jnp.einsum('...bi,bio->...bo', xi, w1[0])
                          + jnp.einsum('...bi,bio->...bo', xr, w1[1]) + b1[1])
        o2r = (jnp.einsum('...bi,bio->...bo', o1r, w2[0])
               - jnp.einsum('...bi,bio->...bo', o1i, w2[1]) + b2[0])
        o2i = (jnp.einsum('...bi,bio->...bo', o1i, w2[0])
               + jnp.einsum('...bi,bio->...bo', o1r, w2[1]) + b2[1])
        o2r = _softshrink(o2r, sparsity_threshold)
        o2i = _softshrink(o2i, sparsity_threshold)
        pad = M - kept
        o2r = jnp.pad(o2r, ((0, 0), (0, pad), (0, 0), (0, 0)))
        o2i = jnp.pad(o2i, ((0, 0), (0, pad), (0, 0), (0, 0)))
        oc = (o2r + 1j * o2i).reshape(B, M, C)
        out = jnp.fft.irfft(oc, n=N, axis=1, norm='ortho')
        return out.astype(v.dtype) + bias_v

    residual = x
    h = ln(x, g1, be1)
    h = afno(h)
    if double_skip:
        h = h + residual
        residual = h
    y = ln(h, g2, be2)
    y = jax.nn.gelu(y @ fw1 + fb1, approximate=False) @ fw2 + fb2
    return y + residual


if __name__ == "__main__":
    # AFNO_Block config (small but consistent with the module)
    dim = 32                   # hidden_size / channel dim C
    num_blocks = 4
    block_size = dim // num_blocks
    hidden_size_factor = 1
    mlp_ratio = 4.0
    mlp_hidden = int(dim * mlp_ratio)
    sparsity_threshold = 0.01
    hard_thresholding_fraction = 1.0
    scale = 0.02
    B, N = 2, 16               # input: (B, N, C)

    key = jax.random.PRNGKey(0)
    keys = jax.random.split(key, 12)
    x = jax.random.normal(keys[0], (B, N, dim), dtype=jnp.float32)

    g1 = 1.0 + 0.1 * jax.random.normal(keys[1], (dim,), jnp.float32)
    be1 = 0.05 * jax.random.normal(keys[2], (dim,), jnp.float32)
    w1 = scale * jax.random.normal(
        keys[3], (2, num_blocks, block_size, block_size * hidden_size_factor), jnp.float32)
    b1 = scale * jax.random.normal(
        keys[4], (2, num_blocks, block_size * hidden_size_factor), jnp.float32)
    w2 = scale * jax.random.normal(
        keys[5], (2, num_blocks, block_size * hidden_size_factor, block_size), jnp.float32)
    b2 = scale * jax.random.normal(keys[6], (2, num_blocks, block_size), jnp.float32)
    g2 = 1.0 + 0.1 * jax.random.normal(keys[7], (dim,), jnp.float32)
    be2 = 0.05 * jax.random.normal(keys[8], (dim,), jnp.float32)
    fw1 = jax.random.normal(keys[9], (dim, mlp_hidden), jnp.float32) / jnp.sqrt(dim)
    fb1 = 0.02 * jax.random.normal(keys[10], (mlp_hidden,), jnp.float32)
    fw2 = jax.random.normal(keys[11], (mlp_hidden, dim), jnp.float32) / jnp.sqrt(mlp_hidden)
    fb2 = jnp.zeros((dim,), jnp.float32)

    params = (g1, be1, w1, b1, w2, b2, g2, be2, fw1, fb1, fw2, fb2)

    out = afno_block_forward(
        x, params, num_blocks=num_blocks, sparsity_threshold=sparsity_threshold,
        hard_thresholding_fraction=hard_thresholding_fraction, double_skip=True)
    out = jax.block_until_ready(out)

    ref = _reference_block(
        x, params, num_blocks=num_blocks, sparsity_threshold=sparsity_threshold,
        hard_thresholding_fraction=hard_thresholding_fraction, double_skip=True)
    ref = jax.block_until_ready(ref)

    assert out.shape == (B, N, dim) and out.dtype == x.dtype
    # bf16 MXU operands are used in BOTH the spectral MLP and the token MLP, plus
    # a bf16 spectral writeback -> compare at bf16-level tolerances.
    max_err = float(jnp.max(jnp.abs(out - ref)))
    rel_err = float(jnp.linalg.norm(out - ref) / jnp.linalg.norm(ref))
    assert max_err < 5e-2 and rel_err < 1e-2, (max_err, rel_err)
    print("KERNEL_OK")
</pallas_src>

<mosaic_0001>
module attributes {stable_mosaic.version = 11 : i64} {
  func.func @layernorm_kernel(%arg0: i32, %arg1: memref<32x32xf32, #tpu.memory_space<vmem>>, %arg2: memref<1x32xf32, #tpu.memory_space<vmem>>, %arg3: memref<1x32xf32, #tpu.memory_space<vmem>>, %arg4: memref<32x32xf32, #tpu.memory_space<vmem>>) attributes {dimension_semantics = [#tpu.dimension_semantics<parallel>], iteration_bounds = array<i64: 1>, scalar_prefetch = 0 : i64, scratch_operands = 0 : i64, tpu.core_type = #tpu.core_type<tc>, window_params = [{transform_indices = @transform_0, window_bounds = array<i64: 32, 32>}, {pipeline_mode = #tpu.pipeline_mode<synchronous>, transform_indices = @transform_1, window_bounds = array<i64: 1, 32>}, {pipeline_mode = #tpu.pipeline_mode<synchronous>, transform_indices = @transform_2, window_bounds = array<i64: 1, 32>}, {transform_indices = @transform_3, window_bounds = array<i64: 32, 32>}]} {
    %c0 = arith.constant 0 : index
    %c0_0 = arith.constant 0 : index
    %0 = vector.load %arg1[%c0, %c0_0] : memref<32x32xf32, #tpu.memory_space<vmem>>, vector<32x32xf32>
    %cst = arith.constant dense<0.000000e+00> : vector<32xf32>
    %1 = vector.multi_reduction <add>, %0, %cst [1] : vector<32x32xf32> to vector<32xf32>
    %2 = vector.shape_cast %1 : vector<32xf32> to vector<32x1xf32>
    %cst_1 = arith.constant 3.200000e+01 : f32
    %3 = vector.broadcast %cst_1 : f32 to vector<32x1xf32>
    %4 = arith.divf %2, %3 : vector<32x1xf32>
    %5 = vector.broadcast %4 : vector<32x1xf32> to vector<32x32xf32>
    %6 = arith.subf %0, %5 : vector<32x32xf32>
    %7 = arith.mulf %6, %6 : vector<32x32xf32>
    %cst_2 = arith.constant dense<0.000000e+00> : vector<32xf32>
    %8 = vector.multi_reduction <add>, %7, %cst_2 [1] : vector<32x32xf32> to vector<32xf32>
    %9 = vector.shape_cast %8 : vector<32xf32> to vector<32x1xf32>
    %cst_3 = arith.constant 3.200000e+01 : f32
    %10 = vector.broadcast %cst_3 : f32 to vector<32x1xf32>
    %11 = arith.divf %9, %10 : vector<32x1xf32>
    %cst_4 = arith.constant 9.99999974E-6 : f32
    %12 = vector.broadcast %cst_4 : f32 to vector<32x1xf32>
    %13 = arith.addf %11, %12 : vector<32x1xf32>
    %14 = math.rsqrt %13 : vector<32x1xf32>
    %15 = vector.broadcast %14 : vector<32x1xf32> to vector<32x32xf32>
    %16 = arith.mulf %6, %15 : vector<32x32xf32>
    %c0_5 = arith.constant 0 : index
    %c0_6 = arith.constant 0 : index
    %17 = vector.load %arg2[%c0_5, %c0_6] : memref<1x32xf32, #tpu.memory_space<vmem>>, vector<1x32xf32>
    %18 = vector.broadcast %17 : vector<1x32xf32> to vector<32x32xf32>
    %19 = arith.mulf %16, %18 : vector<32x32xf32>
    %c0_7 = arith.constant 0 : index
    %c0_8 = arith.constant 0 : index
    %20 = vector.load %arg3[%c0_7, %c0_8] : memref<1x32xf32, #tpu.memory_space<vmem>>, vector<1x32xf32>
    %21 = vector.broadcast %20 : vector<1x32xf32> to vector<32x32xf32>
    %22 = arith.addf %19, %21 : vector<32x32xf32>
    %c0_9 = arith.constant 0 : index
    %c0_10 = arith.constant 0 : index
    %23 = vector.load %arg4[%c0_9, %c0_10] : memref<32x32xf32, #tpu.memory_space<vmem>>, vector<32x32xf32>
    tpu.vector_store %arg4[%c0_9, %c0_10], %22 {strides = array<i32>} : memref<32x32xf32, #tpu.memory_space<vmem>>, vector<32x32xf32>,
    return
  }
  func.func @transform_0(%arg0: i32) -> (i32, i32) {
    %c0_i32 = arith.constant 0 : i32
    %c0_i32_0 = arith.constant 0 : i32
    return %arg0, %c0_i32 : i32, i32
  }
  func.func @transform_1(%arg0: i32) -> (i32, i32) {
    %c0_i32 = arith.constant 0 : i32
    %c0_i32_0 = arith.constant 0 : i32
    %c0_i32_1 = arith.constant 0 : i32
    return %c0_i32, %c0_i32_0 : i32, i32
  }
  func.func @transform_2(%arg0: i32) -> (i32, i32) {
    %c0_i32 = arith.constant 0 : i32
    %c0_i32_0 = arith.constant 0 : i32
    %c0_i32_1 = arith.constant 0 : i32
    return %c0_i32, %c0_i32_0 : i32, i32
  }
  func.func @transform_3(%arg0: i32) -> (i32, i32) {
    %c0_i32 = arith.constant 0 : i32
    %c0_i32_0 = arith.constant 0 : i32
    return %arg0, %c0_i32 : i32, i32
  }
}

</mosaic_0001>

<llo_original>
// kernel: tpu_custom_call.1
$region0: #{tpu_custom_call.1}
  #allocation0 [shape = 'u32[]', space=smem, size = 0x4, offset = 0x4, fixed_abs, tag = 'smem constant byte address 0x4 - core index']
  #allocation1 [shape = 'u32[72,128]{1,0:T(1,128)}', space=vmem, size = 0x9000, scoped, tag = 'internal scratch']
  %s0 = inlined_call_operand.hbm [shape: f32[32,32], index: 0, kind: input, shape index: {}]
  %s1 = inlined_call_operand.hbm [shape: f32[1,32], index: 1, kind: input, shape index: {}]
  %s2 = inlined_call_operand.vmem [shape: f32[1,32], index: 2, kind: input, shape index: {}]
  %s3 = inlined_call_operand.hbm [shape: f32[32,32], index: 3, kind: output, shape index: {}]
  %s4 = sld [smem:[#allocation0]]
  $region30: #{tpu_custom_call.1} parent=0
    _
  %s6 = ssub.s32 1, %s4
  %s7 = scalar_select 0, %s6, %s4
  $region1: #{tpu_custom_call.1} parent=0
    #allocation2 [shape = 'u8[16384]{0}', space=vmem, size = 0x4000, scoped, tag = 'input window, operand 0, single buffered']
    #allocation3 [shape = 's32[1]{0}', space=sflag, size = 0x4, scoped, tag = 'scoped memory for tpu_custom_call.1']
    #allocation4 [shape = 's32[1]{0}', space=sflag, size = 0x4, scoped, tag = 'scoped memory for tpu_custom_call.1']
    #allocation5 [shape = 'u8[512]{0}', space=vmem, size = 0x400, scoped, tag = 'input window, operand 1, single buffered']
    #allocation6 [shape = 's32[1]{0}', space=sflag, size = 0x4, scoped, tag = 'scoped memory for tpu_custom_call.1']
    #allocation7 [shape = 'u8[16384]{0}', space=vmem, size = 0x4000, scoped, tag = 'output window, operand 0, single buffered']
    %8 = vsyncpa [#allocation3], 0
    %9 = vsyncpa [#allocation6], 0
    %10 = vsyncpa [#allocation4], 0
    // Predicated region
    $region2: #{tpu_custom_call.1} parent=1 // pred_check
      _
    $region3: #{tpu_custom_call.1} parent=1 // pred_check_branch
      %12 = sbr.rel (0) target = $region5
    $region4: #{tpu_custom_call.1} parent=1 // pred_region
      %14 = vsyncadd [#allocation3], 0
      %s15 = sshll.u32 %s0, 4
      %s16 = int_to_ptr.hbm [resolvable:$true] %s15
      %s17 = sshll.u32 [#allocation2], 4
      %s18 = int_to_ptr.vmem [resolvable:$true] %s17
      %23 = dma.hbm_to_vmem [thread:$0]  %s16, 512, %s18, [#allocation3], 128, 128, 8
    $region5: #{tpu_custom_call.1} parent=1 // pred_fallthru
      _
    // Predicated region
    $region6: #{tpu_custom_call.1} parent=1 // pred_check
      _
    $region7: #{tpu_custom_call.1} parent=1 // pred_check_branch
      %25 = sbr.rel (0) target = $region9
    $region8: #{tpu_custom_call.1} parent=1 // pred_region
      %27 = vsyncadd [#allocation6], 0
      %s29 = sshll.u32 %s1, 4
      %s30 = int_to_ptr.hbm [resolvable:$true] %s29
      %s31 = sshll.u32 [#allocation5], 4
      %s32 = int_to_ptr.vmem [resolvable:$true] %s31
      %34 = dma.hbm_to_vmem [thread:$0]  %s30, 16, %s32, [#allocation6]
    $region9: #{tpu_custom_call.1} parent=1 // pred_fallthru
      _
    // Predicated region
    $region10: #{tpu_custom_call.1} parent=1 // pred_check
      _
    $region11: #{tpu_custom_call.1} parent=1 // pred_check_branch
      %36 = sbr.rel (0) target = $region13
    $region12: #{tpu_custom_call.1} parent=1 // pred_region
      _
    $region13: #{tpu_custom_call.1} parent=1 // pred_fallthru
      _
    // Predicated region
    $region14: #{tpu_custom_call.1} parent=1 // pred_check
      _
    $region15: #{tpu_custom_call.1} parent=1 // pred_check_branch
      %38 = sbr.rel (0) target = $region17
    $region16: #{tpu_custom_call.1} parent=1 // pred_region
      %40 = dma.done [#allocation3], 512
    $region17: #{tpu_custom_call.1} parent=1 // pred_fallthru
      _
    // Predicated region
    $region18: #{tpu_custom_call.1} parent=1 // pred_check
      _
    $region19: #{tpu_custom_call.1} parent=1 // pred_check_branch
      %42 = sbr.rel (0) target = $region21
    $region20: #{tpu_custom_call.1} parent=1 // pred_region
      %44 = dma.done [#allocation6], 16
    $region21: #{tpu_custom_call.1} parent=1 // pred_fallthru
      _
    %v45 = vld [vmem:[#allocation2] sm:$0xff]
    %v46 = vld [vmem:[#allocation2 + $0x8] sm:$0xff]
    %v47 = vld [vmem:[#allocation2 + $0x10] sm:$0xff]
    %v48 = vld [vmem:[#allocation2 + $0x18] sm:$0xff]
    %vm49 = vcmask 261120
    %v50 = vsel %vm49, %v45, 0.0
    %51 = vadd.xlane.f32.xlu0 %v50
    %v52 = vpop.xlane.xlu0 %51
    %v53 = vsel %vm49, %v46, 0.0
    %54 = vadd.xlane.f32.xlu0 %v53
    %v55 = vpop.xlane.xlu0 %54
    %v56 = vsel %vm49, %v47, 0.0
    %57 = vadd.xlane.f32.xlu0 %v56
    %v58 = vpop.xlane.xlu0 %57
    %v59 = vsel %vm49, %v48, 0.0
    %60 = vadd.xlane.f32.xlu0 %v59
    %v61 = vpop.xlane.xlu0 %60
    %v62 = vrcp.pop 32.0
    %v63 = vmul.f32 32.0, %v62
    %v64 = vsub.f32 1.0, %v63
    %v65 = vmul.f32 %v62, %v64
    %v66 = vadd.f32 %v62, %v65
    %vm67 = vweird.f32 %v62
    %v68 = vsel %vm67, %v62, %v66
    %v69 = vmul.f32 %v52, %v68
    %v70 = vmul.f32 %v55, %v68
    %v71 = vmul.f32 %v58, %v68
    %v72 = vmul.f32 %v61, %v68
    %v73 = vsub.f32 %v45, %v69
    %v74 = vsub.f32 %v46, %v70
    %v75 = vsub.f32 %v47, %v71
    %v76 = vsub.f32 %v48, %v72
    %v77 = vmul.f32 %v73, %v73
    %v78 = vmul.f32 %v74, %v74
    %v79 = vmul.f32 %v75, %v75
    %v80 = vmul.f32 %v76, %v76
    %v81 = vsel %vm49, %v77, 0.0
    %82 = vadd.xlane.f32.xlu0 %v81
    %v83 = vpop.xlane.xlu0 %82
    %v84 = vsel %vm49, %v78, 0.0
    %85 = vadd.xlane.f32.xlu0 %v84
    %v86 = vpop.xlane.xlu0 %85
    %v87 = vsel %vm49, %v79, 0.0
    %88 = vadd.xlane.f32.xlu0 %v87
    %v89 = vpop.xlane.xlu0 %88
    %v90 = vsel %vm49, %v80, 0.0
    %91 = vadd.xlane.f32.xlu0 %v90
    %v92 = vpop.xlane.xlu0 %91
    %v93 = vmul.f32 %v83, %v68
    %v94 = vmul.f32 %v86, %v68
    %v95 = vmul.f32 %v89, %v68
    %v96 = vmul.f32 %v92, %v68
    %v97 = vadd.f32 %v93, 1e-05
    %v98 = vadd.f32 %v94, 1e-05
    %v99 = vadd.f32 %v95, 1e-05
    %v100 = vadd.f32 %v96, 1e-05
    %v101 = vrsqrt.pop %v97
    %v102 = vmul.f32 %v101, %v97
    %v103 = vmul.f32 %v102, %v101
    %v104 = vmul.f32 0.5, %v103
    %v105 = vsub.f32 1.5, %v104
    %v106 = vmul.f32 %v101, %v105
    %vm107 = vweird.f32 %v97
    %vm108 = vweird.f32 %v101
    %vm109 = vmor %vm107, %vm108
    %v110 = vsel %vm109, %v101, %v106
    %v111 = vrsqrt.pop %v98
    %v112 = vmul.f32 %v111, %v98
    %v113 = vmul.f32 %v112, %v111
    %v114 = vmul.f32 0.5, %v113
    %v115 = vsub.f32 1.5, %v114
    %v116 = vmul.f32 %v111, %v115
    %vm117 = vweird.f32 %v98
    %vm118 = vweird.f32 %v111
    %vm119 = vmor %vm117, %vm118
    %v120 = vsel %vm119, %v111, %v116
    %v121 = vrsqrt.pop %v99
    %v122 = vmul.f32 %v121, %v99
    %v123 = vmul.f32 %v122, %v121
    %v124 = vmul.f32 0.5, %v123
    %v125 = vsub.f32 1.5, %v124
    %v126 = vmul.f32 %v121, %v125
    %vm127 = vweird.f32 %v99
    %vm128 = vweird.f32 %v121
    %vm129 = vmor %vm127, %vm128
    %v130 = vsel %vm129, %v121, %v126
    %v131 = vrsqrt.pop %v100
    %v132 = vmul.f32 %v131, %v100
    %v133 = vmul.f32 %v132, %v131
    %v134 = vmul.f32 0.5, %v133
    %v135 = vsub.f32 1.5, %v134
    %v136 = vmul.f32 %v131, %v135
    %vm137 = vweird.f32 %v100
    %vm138 = vweird.f32 %v131
    %vm139 = vmor %vm137, %vm138
    %v140 = vsel %vm139, %v131, %v136
    %v141 = vmul.f32 %v73, %v110
    %v142 = vmul.f32 %v74, %v120
    %v143 = vmul.f32 %v75, %v130
    %v144 = vmul.f32 %v76, %v140
    %v145 = vld [vmem:[#allocation5] sm:$0x1]
    %v147 = vperm.slane %v145, 0
    %v149 = vmul.f32 %v141, %v147
    %v150 = vmul.f32 %v142, %v147
    %v151 = vmul.f32 %v143, %v147
    %v152 = vmul.f32 %v144, %v147
    %v153 = vld [vmem:[%s2] sm:$0x1]
    %v155 = vperm.slane %v153, 0
    %v157 = vadd.f32 %v149, %v155
    %v158 = vadd.f32 %v150, %v155
    %v159 = vadd.f32 %v151, %v155
    %v160 = vadd.f32 %v152, %v155
    %161 = vst.msk [vmem:[#allocation7] sm:$0xff] %vm49, %v157
    %162 = vst.msk [vmem:[#allocation7 + $0x8] sm:$0xff] %vm49, %v158
    %163 = vst.msk [vmem:[#allocation7 + $0x10] sm:$0xff] %vm49, %v159
    %164 = vst.msk [vmem:[#allocation7 + $0x18] sm:$0xff] %vm49, %v160
    // Predicated region
    $region22: #{tpu_custom_call.1} parent=1 // pred_check
      _
    $region23: #{tpu_custom_call.1} parent=1 // pred_check_branch
      %166 = sbr.rel (0) target = $region25
    $region24: #{tpu_custom_call.1} parent=1 // pred_region
      %168 = vsyncadd [#allocation4], 0
      %s169 = sshll.u32 [#allocation7], 4
      %s170 = int_to_ptr.vmem [resolvable:$true] %s169
      %s171 = sshll.u32 %s3, 4
      %s172 = int_to_ptr.hbm [resolvable:$true] %s171
      %177 = dma.vmem_to_hbm [thread:$0]  %s170, 512, %s172, [#allocation4], 128, 128, 8
    $region25: #{tpu_custom_call.1} parent=1 // pred_fallthru
      _
    // Predicated region
    $region26: #{tpu_custom_call.1} parent=1 // pred_check
      _
    $region27: #{tpu_custom_call.1} parent=1 // pred_check_branch
      %179 = sbr.rel (0) target = $region29
    $region28: #{tpu_custom_call.1} parent=1 // pred_region
      %181 = dma.done [#allocation4], 512
    $region29: #{tpu_custom_call.1} parent=1 // pred_fallthru
      _
    %182 = vsyncpa [#allocation3], 1
    %183 = vsyncpa [#allocation6], 1
    %184 = vsyncpa [#allocation4], 1

</llo_original>
